<compile_context>
chip_gen: v6e
topology: v6e:2x2x1
jax: 0.10.0
libtpu: 0.0.40
codegen_flags: <defaults>
</compile_context>

<pallas_src>
import functools

import jax
import jax.numpy as jnp
from jax.experimental import pallas as pl
from jax.experimental.pallas import tpu as pltpu


def _round_up(x, m):
    return ((x + m - 1) // m) * m


def _decoder_fused_kernel(*refs, n_layers):
    """refs = (x_ref, w0, b0, w1, b1, ..., w{L-1}, b{L-1}, o_ref).

    Chains all Linear(+bias)+activation layers for one batch tile, keeping all
    intermediates on-chip.  LeakyReLU(0.2) for every layer except the last,
    which uses Sigmoid.  Matmuls run on the MXU in bf16 with f32 accumulation;
    all elementwise math is f32.
    """
    x_ref = refs[0]
    o_ref = refs[-1]
    wb_refs = refs[1:-1]

    h = x_ref[...].astype(jnp.float32)
    for li in range(n_layers):
        w = wb_refs[2 * li][...]          # bf16, VMEM-resident
        b = wb_refs[2 * li + 1][...]      # f32  [1, Dout]
        y = jnp.dot(h.astype(jnp.bfloat16), w,
                    preferred_element_type=jnp.float32) + b     # [TB, Dout_li]
        if li < n_layers - 1:
            h = jnp.where(y >= 0, y, jnp.float32(0.2) * y)       # LeakyReLU(0.2), VPU f32
        else:
            h = jax.nn.sigmoid(y)                                # EUP logistic, f32
    o_ref[...] = h.astype(o_ref.dtype)


def decoder_forward(params, x, *, max_batch_tile=1024, out_dtype=None):
    """Fused decoder forward.

    params: list of (w: [Din, Dout] f32, b: [1, Dout] f32) per layer
            (w is the transpose of PyTorch's [out, in] layout).
    x:      [B, latent_dim] f32.
    Returns [B, output_dim] in out_dtype (default: x.dtype).
    """
    B, Din0 = x.shape
    n_layers = len(params)
    Dout_final = params[-1][0].shape[1]
    out_dtype = x.dtype if out_dtype is None else jnp.dtype(out_dtype)

    # ---- host-side weight prep: lane-dense hidden widths + bf16 MXU operands ----
    padded = []
    prev_out_pad = Din0                      # latent/K dim intentionally unpadded
    for li, (w, b) in enumerate(params):
        din, dout = w.shape
        dout_pad = dout if li == n_layers - 1 else _round_up(dout, 128)
        w_p = jnp.zeros((prev_out_pad, dout_pad), jnp.float32).at[:din, :dout].set(w)
        b_p = jnp.zeros((1, dout_pad), jnp.float32).at[:, :dout].set(b.reshape(1, -1))
        padded.append((w_p.astype(jnp.bfloat16), b_p))
        prev_out_pad = dout_pad

    # ---- batch tiling: big tiles, >=2 tiles when possible, bounded padding ----
    b_pad8 = _round_up(B, 8)
    n_tiles = max(1, pl.cdiv(b_pad8, max_batch_tile))
    if n_tiles == 1 and b_pad8 >= 16:
        n_tiles = 2                          # keep both v7x TensorCores busy
    tb = _round_up(pl.cdiv(b_pad8, n_tiles), 8)
    b_padded = tb * n_tiles
    if b_padded != B:
        x = jnp.pad(x, ((0, b_padded - B), (0, 0)))

    # Input specs: batch-tiled activations + VMEM-resident (pinned) weights/biases.
    in_specs = [pl.BlockSpec((tb, Din0), lambda i: (i, 0))]
    flat_wb = []
    for w_p, b_p in padded:
        in_specs.append(pl.BlockSpec(w_p.shape, lambda i: (0, 0)))   # resident weight
        in_specs.append(pl.BlockSpec(b_p.shape, lambda i: (0, 0)))   # resident bias
        flat_wb.extend((w_p, b_p))

    # Advisory cost estimate (padded work actually performed by the kernel).
    flops = sum(2 * b_padded * w_p.shape[0] * w_p.shape[1] for w_p, _ in padded)
    transcendentals = b_padded * Dout_final
    bytes_accessed = (
        b_padded * Din0 * x.dtype.itemsize
        + b_padded * Dout_final * out_dtype.itemsize
        + sum(w_p.size * w_p.dtype.itemsize + b_p.size * b_p.dtype.itemsize
              for w_p, b_p in padded)
    )

    kernel = functools.partial(_decoder_fused_kernel, n_layers=n_layers)
    out = pl.pallas_call(
        kernel,
        out_shape=jax.ShapeDtypeStruct((b_padded, Dout_final), out_dtype),
        grid=(n_tiles,),
        in_specs=in_specs,
        out_specs=pl.BlockSpec((tb, Dout_final), lambda i: (i, 0)),
        compiler_params=pltpu.CompilerParams(
            dimension_semantics=("parallel",),   # batch tiles are independent
        ),
        cost_estimate=pl.CostEstimate(
            flops=int(flops),
            transcendentals=int(transcendentals),
            bytes_accessed=int(bytes_accessed),
        ),
    )(x, *flat_wb)
    return out[:B]


def init_decoder_params(key, output_dim, latent_dim, hidden_dims):
    """Deterministic init mimicking PyTorch nn.Linear default U[-1/sqrt(fan_in), +).

    Layer dims follow the PyTorch module construction:
      Linear(latent, hidden[-1]); Linear(hidden[i+1], hidden[i]) for i reversed;
      Linear(hidden[0], output_dim).
    """
    dims = [latent_dim, hidden_dims[-1]]
    for i in reversed(range(len(hidden_dims) - 1)):
        dims.append(hidden_dims[i])
    dims.append(output_dim)

    params = []
    for li in range(len(dims) - 1):
        fan_in, fan_out = dims[li], dims[li + 1]
        key, kw, kb = jax.random.split(key, 3)
        bound = 1.0 / jnp.sqrt(jnp.float32(fan_in))
        w = jax.random.uniform(kw, (fan_in, fan_out), jnp.float32, -bound, bound)
        b = jax.random.uniform(kb, (1, fan_out), jnp.float32, -bound, bound)
        params.append((w, b))
    return params


def decoder_forward_ref(params, x):
    """Pure-JAX f32 reference for correctness checking."""
    h = x
    n_layers = len(params)
    for li, (w, b) in enumerate(params):
        y = h @ w + b
        if li == n_layers - 1:
            h = jax.nn.sigmoid(y)
        else:
            h = jnp.where(y >= 0, y, 0.2 * y)
    return h


if __name__ == "__main__":
    # Small shapes consistent with the module: VAE decoder from latent -> flat image.
    batch = 24                  # exercises 2 grid tiles + tail padding + final slice
    latent_dim = 16
    hidden_dims = [32, 64]      # decoder path: latent -> 64 -> 32 -> output
    output_dim = 256            # e.g. a 16x16 single-channel image, flattened

    key = jax.random.PRNGKey(0)
    key, kx = jax.random.split(key)
    z = jax.random.normal(kx, (batch, latent_dim), jnp.float32)

    params = init_decoder_params(key, output_dim, latent_dim, hidden_dims)

    out = decoder_forward(params, z)
    out = jax.block_until_ready(out)

    ref = decoder_forward_ref(params, z)
    assert out.shape == (batch, output_dim)
    # bf16 MXU operands with f32 accumulation -> loosened tolerance vs f32 reference.
    assert jnp.allclose(out, ref, atol=2e-2, rtol=2e-2), float(jnp.max(jnp.abs(out - ref)))

    print("KERNEL_OK")
</pallas_src>

<mosaic_0001>
module attributes {stable_mosaic.version = 11 : i64} {
  func.func @_decoder_fused_kernel(%arg0: i32, %arg1: memref<16x16xf32, #tpu.memory_space<vmem>>, %arg2: memref<16x128xbf16, #tpu.memory_space<vmem>>, %arg3: memref<1x128xf32, #tpu.memory_space<vmem>>, %arg4: memref<128x128xbf16, #tpu.memory_space<vmem>>, %arg5: memref<1x128xf32, #tpu.memory_space<vmem>>, %arg6: memref<128x256xbf16, #tpu.memory_space<vmem>>, %arg7: memref<1x256xf32, #tpu.memory_space<vmem>>, %arg8: memref<16x256xf32, #tpu.memory_space<vmem>>) attributes {dimension_semantics = [#tpu.dimension_semantics<parallel>], iteration_bounds = array<i64: 2>, scalar_prefetch = 0 : i64, scratch_operands = 0 : i64, tpu.core_type = #tpu.core_type<tc>, window_params = [{transform_indices = @transform_0, window_bounds = array<i64: 16, 16>}, {pipeline_mode = #tpu.pipeline_mode<synchronous>, transform_indices = @transform_1, window_bounds = array<i64: 16, 128>}, {pipeline_mode = #tpu.pipeline_mode<synchronous>, transform_indices = @transform_2, window_bounds = array<i64: 1, 128>}, {pipeline_mode = #tpu.pipeline_mode<synchronous>, transform_indices = @transform_3, window_bounds = array<i64: 128, 128>}, {pipeline_mode = #tpu.pipeline_mode<synchronous>, transform_indices = @transform_4, window_bounds = array<i64: 1, 128>}, {pipeline_mode = #tpu.pipeline_mode<synchronous>, transform_indices = @transform_5, window_bounds = array<i64: 128, 256>}, {pipeline_mode = #tpu.pipeline_mode<synchronous>, transform_indices = @transform_6, window_bounds = array<i64: 1, 256>}, {transform_indices = @transform_7, window_bounds = array<i64: 16, 256>}]} {
    %c0 = arith.constant 0 : index
    %c0_0 = arith.constant 0 : index
    %0 = vector.load %arg1[%c0, %c0_0] : memref<16x16xf32, #tpu.memory_space<vmem>>, vector<16x16xf32>
    %c0_1 = arith.constant 0 : index
    %c0_2 = arith.constant 0 : index
    %1 = vector.load %arg2[%c0_1, %c0_2] : memref<16x128xbf16, #tpu.memory_space<vmem>>, vector<16x128xbf16>
    %c0_3 = arith.constant 0 : index
    %c0_4 = arith.constant 0 : index
    %2 = vector.load %arg3[%c0_3, %c0_4] : memref<1x128xf32, #tpu.memory_space<vmem>>, vector<1x128xf32>
    %3 = arith.truncf %0 : vector<16x16xf32> to vector<16x16xbf16>
    %cst = arith.constant dense<0.000000e+00> : vector<16x128xf32>
    %4 = tpu.matmul %3, %1, %cst {dimension_numbers = #tpu.dot_dimension_numbers<[1], [0], [0], [1], [0, 0, 1, 1], [], []>} : vector<16x16xbf16>, vector<16x128xbf16>, vector<16x128xf32> -> vector<16x128xf32>
    %5 = vector.broadcast %2 : vector<1x128xf32> to vector<16x128xf32>
    %6 = arith.addf %4, %5 : vector<16x128xf32>
    %cst_5 = arith.constant 0.000000e+00 : f32
    %7 = vector.broadcast %cst_5 : f32 to vector<16x128xf32>
    %8 = arith.cmpf oge, %6, %7 : vector<16x128xf32>
    %cst_6 = arith.constant 2.000000e-01 : f32
    %9 = vector.broadcast %cst_6 : f32 to vector<16x128xf32>
    %10 = arith.mulf %9, %6 : vector<16x128xf32>
    %11 = arith.select %8, %6, %10 : vector<16x128xi1>, vector<16x128xf32>
    %c0_7 = arith.constant 0 : index
    %c0_8 = arith.constant 0 : index
    %12 = vector.load %arg4[%c0_7, %c0_8] : memref<128x128xbf16, #tpu.memory_space<vmem>>, vector<128x128xbf16>
    %c0_9 = arith.constant 0 : index
    %c0_10 = arith.constant 0 : index
    %13 = vector.load %arg5[%c0_9, %c0_10] : memref<1x128xf32, #tpu.memory_space<vmem>>, vector<1x128xf32>
    %14 = arith.truncf %11 : vector<16x128xf32> to vector<16x128xbf16>
    %cst_11 = arith.constant dense<0.000000e+00> : vector<16x128xf32>
    %15 = tpu.matmul %14, %12, %cst_11 {dimension_numbers = #tpu.dot_dimension_numbers<[1], [0], [0], [1], [0, 0, 1, 1], [], []>} : vector<16x128xbf16>, vector<128x128xbf16>, vector<16x128xf32> -> vector<16x128xf32>
    %16 = vector.broadcast %13 : vector<1x128xf32> to vector<16x128xf32>
    %17 = arith.addf %15, %16 : vector<16x128xf32>
    %cst_12 = arith.constant 0.000000e+00 : f32
    %18 = vector.broadcast %cst_12 : f32 to vector<16x128xf32>
    %19 = arith.cmpf oge, %17, %18 : vector<16x128xf32>
    %cst_13 = arith.constant 2.000000e-01 : f32
    %20 = vector.broadcast %cst_13 : f32 to vector<16x128xf32>
    %21 = arith.mulf %20, %17 : vector<16x128xf32>
    %22 = arith.select %19, %17, %21 : vector<16x128xi1>, vector<16x128xf32>
    %c0_14 = arith.constant 0 : index
    %c0_15 = arith.constant 0 : index
    %23 = vector.load %arg6[%c0_14, %c0_15] : memref<128x256xbf16, #tpu.memory_space<vmem>>, vector<128x256xbf16>
    %c0_16 = arith.constant 0 : index
    %c0_17 = arith.constant 0 : index
    %24 = vector.load %arg7[%c0_16, %c0_17] : memref<1x256xf32, #tpu.memory_space<vmem>>, vector<1x256xf32>
    %25 = arith.truncf %22 : vector<16x128xf32> to vector<16x128xbf16>
    %cst_18 = arith.constant dense<0.000000e+00> : vector<16x256xf32>
    %26 = tpu.matmul %25, %23, %cst_18 {dimension_numbers = #tpu.dot_dimension_numbers<[1], [0], [0], [1], [0, 0, 1, 1], [], []>} : vector<16x128xbf16>, vector<128x256xbf16>, vector<16x256xf32> -> vector<16x256xf32>
    %27 = vector.broadcast %24 : vector<1x256xf32> to vector<16x256xf32>
    %28 = arith.addf %26, %27 : vector<16x256xf32>
    %29 = arith.negf %28 : vector<16x256xf32>
    %30 = math.exp %29 : vector<16x256xf32>
    %cst_19 = arith.constant 1.000000e+00 : f32
    %31 = vector.broadcast %cst_19 : f32 to vector<16x256xf32>
    %32 = arith.addf %31, %30 : vector<16x256xf32>
    %33 = arith.divf %31, %32 : vector<16x256xf32>
    %c0_20 = arith.constant 0 : index
    %c0_21 = arith.constant 0 : index
    %34 = vector.load %arg8[%c0_20, %c0_21] : memref<16x256xf32, #tpu.memory_space<vmem>>, vector<16x256xf32>
    tpu.vector_store %arg8[%c0_20, %c0_21], %33 {strides = array<i32>} : memref<16x256xf32, #tpu.memory_space<vmem>>, vector<16x256xf32>,
    return
  }
  func.func @transform_0(%arg0: i32) -> (i32, i32) {
    %c0_i32 = arith.constant 0 : i32
    %c0_i32_0 = arith.constant 0 : i32
    return %arg0, %c0_i32 : i32, i32
  }
  func.func @transform_1(%arg0: i32) -> (i32, i32) {
    %c0_i32 = arith.constant 0 : i32
    %c0_i32_0 = arith.constant 0 : i32
    %c0_i32_1 = arith.constant 0 : i32
    return %c0_i32, %c0_i32_0 : i32, i32
  }
  func.func @transform_2(%arg0: i32) -> (i32, i32) {
    %c0_i32 = arith.constant 0 : i32
    %c0_i32_0 = arith.constant 0 : i32
    %c0_i32_1 = arith.constant 0 : i32
    return %c0_i32, %c0_i32_0 : i32, i32
  }
  func.func @transform_3(%arg0: i32) -> (i32, i32) {
    %c0_i32 = arith.constant 0 : i32
    %c0_i32_0 = arith.constant 0 : i32
    %c0_i32_1 = arith.constant 0 : i32
    return %c0_i32, %c0_i32_0 : i32, i32
  }
  func.func @transform_4(%arg0: i32) -> (i32, i32) {
    %c0_i32 = arith.constant 0 : i32
    %c0_i32_0 = arith.constant 0 : i32
    %c0_i32_1 = arith.constant 0 : i32
    return %c0_i32, %c0_i32_0 : i32, i32
  }
  func.func @transform_5(%arg0: i32) -> (i32, i32) {
    %c0_i32 = arith.constant 0 : i32
    %c0_i32_0 = arith.constant 0 : i32
    %c0_i32_1 = arith.constant 0 : i32
    return %c0_i32, %c0_i32_0 : i32, i32
  }
  func.func @transform_6(%arg0: i32) -> (i32, i32) {
    %c0_i32 = arith.constant 0 : i32
    %c0_i32_0 = arith.constant 0 : i32
    %c0_i32_1 = arith.constant 0 : i32
    return %c0_i32, %c0_i32_0 : i32, i32
  }
  func.func @transform_7(%arg0: i32) -> (i32, i32) {
    %c0_i32 = arith.constant 0 : i32
    %c0_i32_0 = arith.constant 0 : i32
    return %arg0, %c0_i32 : i32, i32
  }
}

</mosaic_0001>

<llo_original>
// kernel: tpu_custom_call.1
$region0: #{tpu_custom_call.1}
  #allocation0 [shape = 'u32[]', space=smem, size = 0x4, offset = 0x4, fixed_abs, tag = 'smem constant byte address 0x4 - core index']
  #allocation1 [shape = 'u32[144,128]{1,0:T(1,128)}', space=vmem, size = 0x12000, scoped, tag = 'internal scratch']
  %s0 = inlined_call_operand.vmem [shape: f32[32,16], index: 0, kind: input, shape index: {}]
  %s1 = inlined_call_operand.vmem [shape: bf16[16,128], index: 1, kind: input, shape index: {}]
  %s2 = inlined_call_operand.vmem [shape: f32[1,128], index: 2, kind: input, shape index: {}]
  %s3 = inlined_call_operand.hbm [shape: bf16[128,128], index: 3, kind: input, shape index: {}]
  %s4 = inlined_call_operand.vmem [shape: f32[1,128], index: 4, kind: input, shape index: {}]
  %s5 = inlined_call_operand.hbm [shape: bf16[128,256], index: 5, kind: input, shape index: {}]
  %s6 = inlined_call_operand.vmem [shape: f32[1,256], index: 6, kind: input, shape index: {}]
  %s7 = inlined_call_operand.hbm [shape: f32[32,256], index: 7, kind: output, shape index: {}]
  %s8 = sld [smem:[#allocation0]]
  $region69: #{tpu_custom_call.1} parent=0
    _
  %s10 = ssub.s32 1, %s8
  %s11 = scalar_select 0, %s10, %s8
  $region1: #{tpu_custom_call.1} parent=0
    #allocation2 [shape = 'u8[32768]{0}', space=vmem, size = 0x8000, scoped, tag = 'input window, operand 3, single buffered']
    #allocation3 [shape = 's32[2]{0}', space=sflag, size = 0x8, scoped, tag = 'scoped memory for tpu_custom_call.1']
    #allocation4 [shape = 's32[2]{0}', space=sflag, size = 0x8, scoped, tag = 'scoped memory for tpu_custom_call.1']
    #allocation5 [shape = 'u8[65536]{0}', space=vmem, size = 0x10000, scoped, tag = 'input window, operand 5, single buffered']
    #allocation6 [shape = 's32[1]{0}', space=sflag, size = 0x4, scoped, tag = 'scoped memory for tpu_custom_call.1']
    #allocation7 [shape = 'u8[32768]{0}', space=vmem, size = 0x8000, scoped, tag = 'output window, operand 0']
    %12 = vsyncpa [#allocation3], 0
    %13 = vsyncpa [#allocation6], 0
    %14 = vsyncpa [#allocation4], 0
    %s15 = scalar_lea.sflag [#allocation4], 1
    %16 = vsyncpa %s15, 0
    loop: start=0, step=1, limit=4
    $region2: #{tpu_custom_call.1} parent=1 // loop_pre_header
      _
    $region3: #{tpu_custom_call.1} parent=1 // loop_header
      %s18 = sphi 0, %s22
      %p19 = scmp.ge.s32.totalorder %s18, 4
      %s28 = sphi 0, %s30
      %s31 = sphi 0, %s28
      %s32 = sphi 0, %s31
      %s48 = sphi 0, %s32
      %s52 = sphi 0, %s52
      %s54 = sphi 0, %s52
      %s55 = sphi 0, %s54
      %s69 = sphi 0, %s55
      %s73 = sphi 0, %s73
      %s75 = sphi 0, %s73
      %s76 = sphi 0, %s75
      %s90 = sphi 0, %s76
      %s94 = sphi 0, %s94
      %s96 = sphi 0, %s94
      %s97 = sphi 0, %s96
      %s111 = sphi 0, %s97
      %s115 = sphi 0, %s115
      %s117 = sphi 0, %s115
      %s118 = sphi 0, %s117
      %s132 = sphi 0, %s118
      %s136 = sphi 0, %s136
      %s138 = sphi 0, %s136
      %s139 = sphi 0, %s138
      %s153 = sphi 0, %s139
      %s157 = sphi 0, %s157
      %s159 = sphi 0, %s157
      %s160 = sphi 0, %s159
      %s174 = sphi 0, %s160
      %s180 = sphi 0, %s182
      %s183 = sphi 0, %s180
      %s184 = sphi 0, %s183
      %s200 = sphi 0, %s184
    $region4: #{tpu_custom_call.1} parent=1 // loop_header_branch
      %21 = sbr.rel (%p19) target = $region8
    $region5: #{tpu_custom_call.1} parent=1 // loop_body
      %s23 = ssub.s32 %s18, 1
      %s24 = ssub.s32 %s18, 2
      %s25 = sadd.s32 %s18, 1
      %s26 = ssub.s32 %s18, %s25
      %p27 = scmp.eq.s32.totalorder %s26, 0
      %s29 = sadd.s32 %s28, 1
      %s30 = scalar_select %p27, %s28, %s29
      %p33 = pneg %p27
      %p34 = scmp.eq.s32.totalorder %s18, 1
      %p35 = por %p33, %p34
      %p36 = scmp.ne.s32.totalorder %s28, %s31
      %p37 = scmp.eq.s32.totalorder %s18, 0
      %p38 = por %p36, %p37
      %p39 = scmp.ne.s32.totalorder %s28, %s31
      %p40 = scmp.eq.s32.totalorder %s23, 1
      %p41 = por %p39, %p40
      %p42 = scmp.ne.s32.totalorder %s31, %s32
      %p43 = scmp.eq.s32.totalorder %s23, 0
      %p44 = por %p42, %p43
      %p45 = scmp.ne.s32.totalorder %s31, %s32
      %p46 = scmp.eq.s32.totalorder %s24, 1
      %p47 = por %p45, %p46
      %p49 = scmp.ne.s32.totalorder %s32, %s48
      %p50 = scmp.eq.s32.totalorder %s24, 0
      %p51 = por %p49, %p50
      %s53 = sadd.s32 %s52, 1
      %p56 = scmp.eq.s32.totalorder %s18, 1
      %p57 = scmp.ne.s32.totalorder %s52, %s54
      %p58 = scmp.eq.s32.totalorder %s18, 0
      %p59 = por %p57, %p58
      %p60 = scmp.ne.s32.totalorder %s52, %s54
      %p61 = scmp.eq.s32.totalorder %s23, 1
      %p62 = por %p60, %p61
      %p63 = scmp.ne.s32.totalorder %s54, %s55
      %p64 = scmp.eq.s32.totalorder %s23, 0
      %p65 = por %p63, %p64
      %p66 = scmp.ne.s32.totalorder %s54, %s55
      %p67 = scmp.eq.s32.totalorder %s24, 1
      %p68 = por %p66, %p67
      %p70 = scmp.ne.s32.totalorder %s55, %s69
      %p71 = scmp.eq.s32.totalorder %s24, 0
      %p72 = por %p70, %p71
      %s74 = sadd.s32 %s73, 1
      %p77 = scmp.eq.s32.totalorder %s18, 1
      %p78 = scmp.ne.s32.totalorder %s73, %s75
      %p79 = scmp.eq.s32.totalorder %s18, 0
      %p80 = por %p78, %p79
      %p81 = scmp.ne.s32.totalorder %s73, %s75
      %p82 = scmp.eq.s32.totalorder %s23, 1
      %p83 = por %p81, %p82
      %p84 = scmp.ne.s32.totalorder %s75, %s76
      %p85 = scmp.eq.s32.totalorder %s23, 0
      %p86 = por %p84, %p85
      %p87 = scmp.ne.s32.totalorder %s75, %s76
      %p88 = scmp.eq.s32.totalorder %s24, 1
      %p89 = por %p87, %p88
      %p91 = scmp.ne.s32.totalorder %s76, %s90
      %p92 = scmp.eq.s32.totalorder %s24, 0
      %p93 = por %p91, %p92
      %s95 = sadd.s32 %s94, 1
      %p98 = scmp.eq.s32.totalorder %s18, 1
      %p99 = scmp.ne.s32.totalorder %s94, %s96
      %p100 = scmp.eq.s32.totalorder %s18, 0
      %p101 = por %p99, %p100
      %p102 = scmp.ne.s32.totalorder %s94, %s96
      %p103 = scmp.eq.s32.totalorder %s23, 1
      %p104 = por %p102, %p103
      %p105 = scmp.ne.s32.totalorder %s96, %s97
      %p106 = scmp.eq.s32.totalorder %s23, 0
      %p107 = por %p105, %p106
      %p108 = scmp.ne.s32.totalorder %s96, %s97
      %p109 = scmp.eq.s32.totalorder %s24, 1
      %p110 = por %p108, %p109
      %p112 = scmp.ne.s32.totalorder %s97, %s111
      %p113 = scmp.eq.s32.totalorder %s24, 0
      %p114 = por %p112, %p113
      %s116 = sadd.s32 %s115, 1
      %p119 = scmp.eq.s32.totalorder %s18, 1
      %p120 = scmp.ne.s32.totalorder %s115, %s117
      %p121 = scmp.eq.s32.totalorder %s18, 0
      %p122 = por %p120, %p121
      %p123 = scmp.ne.s32.totalorder %s115, %s117
      %p124 = scmp.eq.s32.totalorder %s23, 1
      %p125 = por %p123, %p124
      %p126 = scmp.ne.s32.totalorder %s117, %s118
      %p127 = scmp.eq.s32.totalorder %s23, 0
      %p128 = por %p126, %p127
      %p129 = scmp.ne.s32.totalorder %s117, %s118
      %p130 = scmp.eq.s32.totalorder %s24, 1
      %p131 = por %p129, %p130
      %p133 = scmp.ne.s32.totalorder %s118, %s132
      %p134 = scmp.eq.s32.totalorder %s24, 0
      %p135 = por %p133, %p134
      %s137 = sadd.s32 %s136, 1
      %p140 = scmp.eq.s32.totalorder %s18, 1
      %p141 = scmp.ne.s32.totalorder %s136, %s138
      %p142 = scmp.eq.s32.totalorder %s18, 0
      %p143 = por %p141, %p142
      %p144 = scmp.ne.s32.totalorder %s136, %s138
      %p145 = scmp.eq.s32.totalorder %s23, 1
      %p146 = por %p144, %p145
      %p147 = scmp.ne.s32.totalorder %s138, %s139
      %p148 = scmp.eq.s32.totalorder %s23, 0
      %p149 = por %p147, %p148
      %p150 = scmp.ne.s32.totalorder %s138, %s139
      %p151 = scmp.eq.s32.totalorder %s24, 1
      %p152 = por %p150, %p151
      %p154 = scmp.ne.s32.totalorder %s139, %s153
      %p155 = scmp.eq.s32.totalorder %s24, 0
      %p156 = por %p154, %p155
      %s158 = sadd.s32 %s157, 1
      %p161 = scmp.eq.s32.totalorder %s18, 1
      %p162 = scmp.ne.s32.totalorder %s157, %s159
      %p163 = scmp.eq.s32.totalorder %s18, 0
      %p164 = por %p162, %p163
      %p165 = scmp.ne.s32.totalorder %s157, %s159
      %p166 = scmp.eq.s32.totalorder %s23, 1
      %p167 = por %p165, %p166
      %p168 = scmp.ne.s32.totalorder %s159, %s160
      %p169 = scmp.eq.s32.totalorder %s23, 0
      %p170 = por %p168, %p169
      %p171 = scmp.ne.s32.totalorder %s159, %s160
      %p172 = scmp.eq.s32.totalorder %s24, 1
      %p173 = por %p171, %p172
      %p175 = scmp.ne.s32.totalorder %s160, %s174
      %p176 = scmp.eq.s32.totalorder %s24, 0
      %p177 = por %p175, %p176
      %s178 = ssub.s32 %s18, %s25
      %p179 = scmp.eq.s32.totalorder %s178, 0
      %s181 = sadd.s32 %s180, 1
      %s182 = scalar_select %p179, %s180, %s181
      %p185 = pneg %p179
      %p186 = scmp.eq.s32.totalorder %s18, 1
      %p187 = por %p185, %p186
      %p188 = scmp.ne.s32.totalorder %s180, %s183
      %p189 = scmp.eq.s32.totalorder %s18, 0
      %p190 = por %p188, %p189
      %p191 = scmp.ne.s32.totalorder %s180, %s183
      %p192 = scmp.eq.s32.totalorder %s23, 1
      %p193 = por %p191, %p192
      %p194 = scmp.ne.s32.totalorder %s183, %s184
      %p195 = scmp.eq.s32.totalorder %s23, 0
      %p196 = por %p194, %p195
      %p197 = scmp.ne.s32.totalorder %s183, %s184
      %p198 = scmp.eq.s32.totalorder %s24, 1
      %p199 = por %p197, %p198
      %p201 = scmp.ne.s32.totalorder %s184, %s200
      %p202 = scmp.eq.s32.totalorder %s24, 0
      %p203 = por %p201, %p202
      %p204 = scmp.le.s32.totalorder 1, %s18
      %p205 = scmp.lt.s32.totalorder %s18, 3
      %p206 = pnand %p204, %p205
      %p207 = pneg %p206
      // Predicated region
      $region9: #{tpu_custom_call.1} parent=5 // pred_check
        _
      $region10: #{tpu_custom_call.1} parent=5 // pred_check_branch
        %209 = sbr.rel (%p206) target = $region12
      $region11: #{tpu_custom_call.1} parent=5 // pred_region
        %s210 = ssub.s32 %s18, 1
        // Predicated region
        $region13: #{tpu_custom_call.1} parent=11 // pred_check
          %p211 = pneg %p65
        $region14: #{tpu_custom_call.1} parent=11 // pred_check_branch
          %213 = sbr.rel (%p211) target = $region16
        $region15: #{tpu_custom_call.1} parent=11 // pred_region
          _
        $region16: #{tpu_custom_call.1} parent=11 // pred_fallthru
          _
        // Predicated region
        $region17: #{tpu_custom_call.1} parent=11 // pred_check
          %p214 = pneg %p86
        $region18: #{tpu_custom_call.1} parent=11 // pred_check_branch
          %216 = sbr.rel (%p214) target = $region20
        $region19: #{tpu_custom_call.1} parent=11 // pred_region
          _
        $region20: #{tpu_custom_call.1} parent=11 // pred_fallthru
          _
        // Predicated region
        $region21: #{tpu_custom_call.1} parent=11 // pred_check
          %p217 = pneg %p107
        $region22: #{tpu_custom_call.1} parent=11 // pred_check_branch
          %219 = sbr.rel (%p217) target = $region24
        $region23: #{tpu_custom_call.1} parent=11 // pred_region
          %s221 = ssub.s32 1024, 1024
          %222 = vsyncadd [#allocation3], %s221
          %s223 = sshll.u32 [#allocation2], 4
          %s224 = int_to_ptr.vmem [resolvable:$true] %s223
          %229 = dma.hbm_to_vmem [thread:$0]  %s3, 1024, %s224, [#allocation3], 64, 64, 4
        $region24: #{tpu_custom_call.1} parent=11 // pred_fallthru
          _
        // Predicated region
        $region25: #{tpu_custom_call.1} parent=11 // pred_check
          %p230 = pneg %p128
        $region26: #{tpu_custom_call.1} parent=11 // pred_check_branch
          %232 = sbr.rel (%p230) target = $region28
        $region27: #{tpu_custom_call.1} parent=11 // pred_region
          _
        $region28: #{tpu_custom_call.1} parent=11 // pred_fallthru
          _
        // Predicated region
        $region29: #{tpu_custom_call.1} parent=11 // pred_check
          %p233 = pneg %p149
        $region30: #{tpu_custom_call.1} parent=11 // pred_check_branch
          %235 = sbr.rel (%p233) target = $region32
        $region31: #{tpu_custom_call.1} parent=11 // pred_region
          %s237 = ssub.s32 2048, 2048
          %238 = vsyncadd [#allocation6], %s237
          %s239 = sshll.u32 [#allocation5], 4
          %s240 = int_to_ptr.vmem [resolvable:$true] %s239
          %245 = dma.hbm_to_vmem [thread:$0]  %s5, 2048, %s240, [#allocation6], 128, 128, 8
        $region32: #{tpu_custom_call.1} parent=11 // pred_fallthru
          _
        // Predicated region
        $region33: #{tpu_custom_call.1} parent=11 // pred_check
          %p246 = pneg %p170
        $region34: #{tpu_custom_call.1} parent=11 // pred_check_branch
          %248 = sbr.rel (%p246) target = $region36
        $region35: #{tpu_custom_call.1} parent=11 // pred_region
          _
        $region36: #{tpu_custom_call.1} parent=11 // pred_fallthru
          _
      $region12: #{tpu_custom_call.1} parent=5 // pred_fallthru
        _
      %p249 = scmp.lt.s32.totalorder %s18, 2
      // Predicated region
      $region37: #{tpu_custom_call.1} parent=5 // pred_check
        %p250 = pneg %p249
      $region38: #{tpu_custom_call.1} parent=5 // pred_check_branch
        %252 = sbr.rel (%p250) target = $region40
      $region39: #{tpu_custom_call.1} parent=5 // pred_region
        // Predicated region
        $region41: #{tpu_custom_call.1} parent=39 // pred_check
          %p253 = pneg %p38
        $region42: #{tpu_custom_call.1} parent=39 // pred_check_branch
          %255 = sbr.rel (%p253) target = $region44
        $region43: #{tpu_custom_call.1} parent=39 // pred_region
          %s256 = smul.u32 2, %s18
          %p257 = scmp.lt.s32.totalorder %s256, 3
          %s258 = scalar_select %p257, %s256, 3
          %s259 = smul.addr %s258, 8
          %s260 = scalar_lea.vmem %s0, %s259
          %s261 = smul.u32 2, %s18
        $region44: #{tpu_custom_call.1} parent=39 // pred_fallthru
          _
      $region40: #{tpu_custom_call.1} parent=5 // pred_fallthru
        _
      %p262 = scmp.le.s32.totalorder 1, %s18
      %p263 = scmp.lt.s32.totalorder %s18, 3
      %p264 = pnand %p262, %p263
      %p265 = pneg %p264
      // Predicated region
      $region45: #{tpu_custom_call.1} parent=5 // pred_check
        _
      $region46: #{tpu_custom_call.1} parent=5 // pred_check_branch
        %267 = sbr.rel (%p264) target = $region48
      $region47: #{tpu_custom_call.1} parent=5 // pred_region
        %s268 = ssub.s32 %s18, 1
        // Predicated region
        $region49: #{tpu_custom_call.1} parent=47 // pred_check
          %p269 = pneg %p107
        $region50: #{tpu_custom_call.1} parent=47 // pred_check_branch
          %271 = sbr.rel (%p269) target = $region52
        $region51: #{tpu_custom_call.1} parent=47 // pred_region
          %272 = dma.done [#allocation3], 1024
        $region52: #{tpu_custom_call.1} parent=47 // pred_fallthru
          _
        // Predicated region
        $region53: #{tpu_custom_call.1} parent=47 // pred_check
          %p273 = pneg %p149
        $region54: #{tpu_custom_call.1} parent=47 // pred_check_branch
          %275 = sbr.rel (%p273) target = $region56
        $region55: #{tpu_custom_call.1} parent=47 // pred_region
          %276 = dma.done [#allocation6], 2048
        $region56: #{tpu_custom_call.1} parent=47 // pred_fallthru
          _
        %s277 = smul.u32 2, %s23
        %p278 = scmp.lt.s32.totalorder %s277, 3
        %s279 = scalar_select %p278, %s277, 3
        %s280 = smul.addr %s279, 8
        %s281 = scalar_lea.vmem %s0, %s280
        %p282 = pneg %p44
        %p283 = pneg %p41
        %p284 = pneg %p65
        %p285 = pneg %p62
        %p286 = pneg %p86
        %p287 = pneg %p83
        %p288 = pneg %p107
        %p289 = pneg %p104
        %p290 = pneg %p128
        %p291 = pneg %p125
        %p292 = pneg %p149
        %p293 = pneg %p146
        %p294 = pneg %p170
        %p295 = pneg %p167
        %p296 = pneg %p196
        %p297 = pneg %p193
        %s298 = sand.u32 %s183, 1
        %s299 = scalar_lea.sflag [#allocation4], %s298
        %s300 = sand.u32 %s183, 1
        %s301 = smul.addr %s300, 32
        %s302 = scalar_lea.vmem [#allocation7], %s301
        %s303 = smul.u32 2, %s23
        %p304 = scmp.lt.s32.totalorder %s303, 3
        %s305 = scalar_select %p304, %s303, 3
        %s306 = smul.addr %s305, 8
        %s307 = scalar_lea.vmem %s0, %s306
        %s308 = smul.u32 2, %s23
        %s309 = smul.u32 2, %s23
        %v311 = vld [vmem:[%s307] sm:$0xff]
        %v312 = vld [vmem:[%s307 + $0x8] sm:$0xff]
        %v313 = vld [vmem:[%s1] sm:$0xf]
        %v314 = vld [vmem:[%s1 + $0x4] sm:$0xf]
        %v315 = vld [vmem:[%s2] sm:$0x1]
        %v316 = vpack.c.bf16 %v312, %v311
        %v318 = vlaneseq
        %v319 = vshrl.u32 %v318, 7
        %v320 = vsub.s32 0, %v319
        %v321 = vrot.slane %v315, %v320
        %v325 = vunpack.c.l.b16 %v313
        %v326 = vunpack.c.l.b16 %v314
        %v327 = vpack.c.b16 %v326, %v325
        %vm329 = vcmask 130048
        %v331 = vsel %vm329, %v316, 0
        %333 = vmatprep.subr.bf16.mxu0 0
        %334 = vmatpush1.bf16.msra.mxu0 0
        %335 = vmatprep.subr.bf16.mxu0 0
        %336 = vmatpush1.bf16.msra.mxu0 0
        %337 = vmatprep.subr.bf16.mxu0 0
        %338 = vmatpush1.bf16.msra.mxu0 0
        %339 = vmatprep.subr.bf16.mxu0 0
        %340 = vmatpush1.bf16.msra.mxu0 0
        %341 = vmatprep.subr.bf16.mxu0 0
        %342 = vmatpush1.bf16.msra.mxu0 0
        %343 = vmatprep.subr.bf16.mxu0 0
        %344 = vmatpush1.bf16.msra.mxu0 0
        %345 = vmatprep.subr.bf16.mxu0 0
        %346 = vmatpush1.bf16.msra.mxu0 0
        %347 = vmatprep.subr.bf16.mxu0 0
        %348 = vmatpush1.bf16.msra.mxu0 %v327
        %349 = vmatprep.subr.bf16.mxu0 0
        %350 = vmatpush2.bf16.msra.mxu0 0
        %351 = vmatprep.subr.bf16.mxu0 0
        %352 = vmatpush2.bf16.msra.mxu0 0
        %353 = vmatprep.subr.bf16.mxu0 0
        %354 = vmatpush2.bf16.msra.mxu0 0
        %355 = vmatprep.subr.bf16.mxu0 0
        %356 = vmatpush2.bf16.msra.mxu0 0
        %357 = vmatprep.subr.bf16.mxu0 0
        %358 = vmatpush2.bf16.msra.mxu0 0
        %359 = vmatprep.subr.bf16.mxu0 0
        %360 = vmatpush2.bf16.msra.mxu0 0
        %361 = vmatprep.subr.bf16.mxu0 0
        %362 = vmatpush2.bf16.msra.mxu0 0
        %363 = vmatprep.subr.bf16.mxu0 0
        %364 = vmatpush2.bf16.msra.mxu0 0
        %365 = vmatprep.mubr.bf16.mxu0 0
        %366 = vmatmul.mubr.bf16.gmra.mxu0 %v331
        %v367 = vpop.f32.mrf.mxu0
        %v368 = vadd.f32 %v321, %v367
        %v369 = vpop.f32.mrf.mxu0
        %v370 = vpop.f32.mrf.mxu0
        %v371 = vadd.f32 %v321, %v370
        %v372 = vpop.f32.mrf.mxu0
        %373 = vdwg.mxu0
        %vm374 = vcmp.ge.f32.partialorder %v368, 0.0
        %vm375 = vcmp.ge.f32.partialorder %v371, 0.0
        %v376 = vmul.f32 %v368, 0.2
        %v377 = vmul.f32 %v371, 0.2
        %v378 = vsel %vm374, %v368, %v376
        %v379 = vsel %vm375, %v371, %v377
        %v380 = vld [vmem:[#allocation2] sm:$0xf]
        %v381 = vld [vmem:[#allocation2 + $0x4] sm:$0xf]
        %v382 = vld [vmem:[#allocation2 + $0x8] sm:$0xf]
        %v383 = vld [vmem:[#allocation2 + $0xc] sm:$0xf]
        %v384 = vld [vmem:[#allocation2 + $0x10] sm:$0xf]
        %v385 = vld [vmem:[#allocation2 + $0x14] sm:$0xf]
        %v386 = vld [vmem:[#allocation2 + $0x18] sm:$0xf]
        %v387 = vld [vmem:[#allocation2 + $0x1c] sm:$0xf]
        %v388 = vld [vmem:[#allocation2 + $0x20] sm:$0xf]
        %v389 = vld [vmem:[#allocation2 + $0x24] sm:$0xf]
        %v390 = vld [vmem:[#allocation2 + $0x28] sm:$0xf]
        %v391 = vld [vmem:[#allocation2 + $0x2c] sm:$0xf]
        %v392 = vld [vmem:[#allocation2 + $0x30] sm:$0xf]
        %v393 = vld [vmem:[#allocation2 + $0x34] sm:$0xf]
        %v394 = vld [vmem:[#allocation2 + $0x38] sm:$0xf]
        %v395 = vld [vmem:[#allocation2 + $0x3c] sm:$0xf]
        %v396 = vld [vmem:[%s4] sm:$0x1]
        %v397 = vpack.c.bf16 %v379, %v378
        %v399 = vlaneseq
        %v400 = vshrl.u32 %v399, 7
        %v401 = vsub.s32 0, %v400
        %v402 = vrot.slane %v396, %v401
        %v420 = vunpack.c.l.b16 %v380
        %v421 = vunpack.c.l.b16 %v381
        %v422 = vunpack.c.l.b16 %v382
        %v423 = vunpack.c.l.b16 %v383
        %v424 = vunpack.c.l.b16 %v384
        %v425 = vunpack.c.l.b16 %v385
        %v426 = vunpack.c.l.b16 %v386
        %v427 = vunpack.c.l.b16 %v387
        %v428 = vunpack.c.l.b16 %v388
        %v429 = vunpack.c.l.b16 %v389
        %v430 = vunpack.c.l.b16 %v390
        %v431 = vunpack.c.l.b16 %v391
        %v432 = vunpack.c.l.b16 %v392
        %v433 = vunpack.c.l.b16 %v393
        %v434 = vunpack.c.l.b16 %v394
        %v435 = vunpack.c.l.b16 %v395
        %v436 = vpack.c.b16 %v421, %v420
        %v437 = vpack.c.b16 %v423, %v422
        %v438 = vpack.c.b16 %v425, %v424
        %v439 = vpack.c.b16 %v427, %v426
        %v440 = vpack.c.b16 %v429, %v428
        %v441 = vpack.c.b16 %v431, %v430
        %v442 = vpack.c.b16 %v433, %v432
        %v443 = vpack.c.b16 %v435, %v434
        %452 = vmatprep.subr.bf16.mxu0 0
        %453 = vmatpush1.bf16.msra.mxu0 %v443
        %454 = vmatprep.subr.bf16.mxu0 0
        %455 = vmatpush1.bf16.msra.mxu0 %v442
        %456 = vmatprep.subr.bf16.mxu0 0
        %457 = vmatpush1.bf16.msra.mxu0 %v441
        %458 = vmatprep.subr.bf16.mxu0 0
        %459 = vmatpush1.bf16.msra.mxu0 %v440
        %460 = vmatprep.subr.bf16.mxu0 0
        %461 = vmatpush1.bf16.msra.mxu0 %v439
        %462 = vmatprep.subr.bf16.mxu0 0
        %463 = vmatpush1.bf16.msra.mxu0 %v438
        %464 = vmatprep.subr.bf16.mxu0 0
        %465 = vmatpush1.bf16.msra.mxu0 %v437
        %466 = vmatprep.subr.bf16.mxu0 0
        %467 = vmatpush1.bf16.msra.mxu0 %v436
        %468 = vmatprep.subr.bf16.mxu0 0
        %469 = vmatpush2.bf16.msra.mxu0 0
        %470 = vmatprep.subr.bf16.mxu0 0
        %471 = vmatpush2.bf16.msra.mxu0 0
        %472 = vmatprep.subr.bf16.mxu0 0
        %473 = vmatpush2.bf16.msra.mxu0 0
        %474 = vmatprep.subr.bf16.mxu0 0
        %475 = vmatpush2.bf16.msra.mxu0 0
        %476 = vmatprep.subr.bf16.mxu0 0
        %477 = vmatpush2.bf16.msra.mxu0 0
        %478 = vmatprep.subr.bf16.mxu0 0
        %479 = vmatpush2.bf16.msra.mxu0 0
        %480 = vmatprep.subr.bf16.mxu0 0
        %481 = vmatpush2.bf16.msra.mxu0 0
        %482 = vmatprep.subr.bf16.mxu0 0
        %483 = vmatpush2.bf16.msra.mxu0 0
        %484 = vmatprep.mubr.bf16.mxu0 0
        %485 = vmatmul.mubr.bf16.gmra.mxu0 %v397
        %v486 = vpop.f32.mrf.mxu0
        %v487 = vadd.f32 %v402, %v486
        %v488 = vpop.f32.mrf.mxu0
        %v489 = vpop.f32.mrf.mxu0
        %v490 = vadd.f32 %v402, %v489
        %v491 = vpop.f32.mrf.mxu0
        %492 = vdwg.mxu0
        %vm493 = vcmp.ge.f32.partialorder %v487, 0.0
        %vm494 = vcmp.ge.f32.partialorder %v490, 0.0
        %v495 = vmul.f32 %v487, 0.2
        %v496 = vmul.f32 %v490, 0.2
        %v497 = vsel %vm493, %v487, %v495
        %v498 = vsel %vm494, %v490, %v496
        %v499 = vld [vmem:[#allocation5] sm:$0xff]
        %v500 = vld [vmem:[#allocation5 + $0x8] sm:$0xff]
        %v501 = vld [vmem:[#allocation5 + $0x10] sm:$0xff]
        %v502 = vld [vmem:[#allocation5 + $0x18] sm:$0xff]
        %v503 = vld [vmem:[#allocation5 + $0x20] sm:$0xff]
        %v504 = vld [vmem:[#allocation5 + $0x28] sm:$0xff]
        %v505 = vld [vmem:[#allocation5 + $0x30] sm:$0xff]
        %v506 = vld [vmem:[#allocation5 + $0x38] sm:$0xff]
        %v507 = vld [vmem:[#allocation5 + $0x40] sm:$0xff]
        %v508 = vld [vmem:[#allocation5 + $0x48] sm:$0xff]
        %v509 = vld [vmem:[#allocation5 + $0x50] sm:$0xff]
        %v510 = vld [vmem:[#allocation5 + $0x58] sm:$0xff]
        %v511 = vld [vmem:[#allocation5 + $0x60] sm:$0xff]
        %v512 = vld [vmem:[#allocation5 + $0x68] sm:$0xff]
        %v513 = vld [vmem:[#allocation5 + $0x70] sm:$0xff]
        %v514 = vld [vmem:[#allocation5 + $0x78] sm:$0xff]
        %v515 = vld [vmem:[%s6] sm:$0x3]
        %v516 = vpack.c.bf16 %v498, %v497
        %v518 = vlaneseq
        %v519 = vshrl.u32 %v518, 7
        %v520 = vsub.s32 0, %v519
        %v521 = vrot.slane %v515, %v520
        %v522 = vlaneseq
        %v523 = vshrl.u32 %v522, 7
        %v524 = vsub.s32 1, %v523
        %v525 = vrot.slane %v515, %v524
        %v544 = vunpack.c.l.b16 %v499
        %v545 = vunpack.c.h.b16 %v499
        %v546 = vunpack.c.l.b16 %v500
        %v547 = vunpack.c.h.b16 %v500
        %v548 = vunpack.c.l.b16 %v501
        %v549 = vunpack.c.h.b16 %v501
        %v550 = vunpack.c.l.b16 %v502
        %v551 = vunpack.c.h.b16 %v502
        %v552 = vunpack.c.l.b16 %v503
        %v553 = vunpack.c.h.b16 %v503
        %v554 = vunpack.c.l.b16 %v504
        %v555 = vunpack.c.h.b16 %v504
        %v556 = vunpack.c.l.b16 %v505
        %v557 = vunpack.c.h.b16 %v505
        %v558 = vunpack.c.l.b16 %v506
        %v559 = vunpack.c.h.b16 %v506
        %v560 = vunpack.c.l.b16 %v507
        %v561 = vunpack.c.h.b16 %v507
        %v562 = vunpack.c.l.b16 %v508
        %v563 = vunpack.c.h.b16 %v508
        %v564 = vunpack.c.l.b16 %v509
        %v565 = vunpack.c.h.b16 %v509
        %v566 = vunpack.c.l.b16 %v510
        %v567 = vunpack.c.h.b16 %v510
        %v568 = vunpack.c.l.b16 %v511
        %v569 = vunpack.c.h.b16 %v511
        %v570 = vunpack.c.l.b16 %v512
        %v571 = vunpack.c.h.b16 %v512
        %v572 = vunpack.c.l.b16 %v513
        %v573 = vunpack.c.h.b16 %v513
        %v574 = vunpack.c.l.b16 %v514
        %v575 = vunpack.c.h.b16 %v514
        %v576 = vpack.c.b16 %v546, %v544
        %v577 = vpack.c.b16 %v547, %v545
        %v578 = vpack.c.b16 %v550, %v548
        %v579 = vpack.c.b16 %v551, %v549
        %v580 = vpack.c.b16 %v554, %v552
        %v581 = vpack.c.b16 %v555, %v553
        %v582 = vpack.c.b16 %v558, %v556
        %v583 = vpack.c.b16 %v559, %v557
        %v584 = vpack.c.b16 %v562, %v560
        %v585 = vpack.c.b16 %v563, %v561
        %v586 = vpack.c.b16 %v566, %v564
        %v587 = vpack.c.b16 %v567, %v565
        %v588 = vpack.c.b16 %v570, %v568
        %v589 = vpack.c.b16 %v571, %v569
        %v590 = vpack.c.b16 %v574, %v572
        %v591 = vpack.c.b16 %v575, %v573
        %608 = vmatprep.subr.bf16.mxu0 %v591
        %609 = vmatpush1.bf16.msra.mxu0 %v590
        %610 = vmatprep.subr.bf16.mxu0 %v589
        %611 = vmatpush1.bf16.msra.mxu0 %v588
        %612 = vmatprep.subr.bf16.mxu0 %v587
        %613 = vmatpush1.bf16.msra.mxu0 %v586
        %614 = vmatprep.subr.bf16.mxu0 %v585
        %615 = vmatpush1.bf16.msra.mxu0 %v584
        %616 = vmatprep.subr.bf16.mxu0 %v583
        %617 = vmatpush1.bf16.msra.mxu0 %v582
        %618 = vmatprep.subr.bf16.mxu0 %v581
        %619 = vmatpush1.bf16.msra.mxu0 %v580
        %620 = vmatprep.subr.bf16.mxu0 %v579
        %621 = vmatpush1.bf16.msra.mxu0 %v578
        %622 = vmatprep.subr.bf16.mxu0 %v577
        %623 = vmatpush1.bf16.msra.mxu0 %v576
        %624 = vmatprep.subr.bf16.mxu0 0
        %625 = vmatpush2.bf16.msra.mxu0 0
        %626 = vmatprep.subr.bf16.mxu0 0
        %627 = vmatpush2.bf16.msra.mxu0 0
        %628 = vmatprep.subr.bf16.mxu0 0
        %629 = vmatpush2.bf16.msra.mxu0 0
        %630 = vmatprep.subr.bf16.mxu0 0
        %631 = vmatpush2.bf16.msra.mxu0 0
        %632 = vmatprep.subr.bf16.mxu0 0
        %633 = vmatpush2.bf16.msra.mxu0 0
        %634 = vmatprep.subr.bf16.mxu0 0
        %635 = vmatpush2.bf16.msra.mxu0 0
        %636 = vmatprep.subr.bf16.mxu0 0
        %637 = vmatpush2.bf16.msra.mxu0 0
        %638 = vmatprep.subr.bf16.mxu0 0
        %639 = vmatpush2.bf16.msra.mxu0 0
        %640 = vmatprep.mubr.bf16.mxu0 0
        %641 = vmatmul.mubr.bf16.gmra.mxu0 %v516
        %v642 = vpop.f32.mrf.mxu0
        %v643 = vadd.f32 %v521, %v642
        %v644 = vpop.f32.mrf.mxu0
        %v645 = vadd.f32 %v525, %v644
        %v646 = vpop.f32.mrf.mxu0
        %v647 = vadd.f32 %v521, %v646
        %v648 = vpop.f32.mrf.mxu0
        %v649 = vadd.f32 %v525, %v648
        %650 = vdwg.mxu0
        %v651 = vxor.u32 %v643, 2147483648
        %v652 = vxor.u32 %v645, 2147483648
        %v653 = vxor.u32 %v647, 2147483648
        %v654 = vxor.u32 %v649, 2147483648
        %v655 = vmul.f32 %v651, 1.442695
        %v656 = vpow.pop %v655
        %v657 = vmul.f32 %v652, 1.442695
        %v658 = vpow.pop %v657
        %v659 = vmul.f32 %v653, 1.442695
        %v660 = vpow.pop %v659
        %v661 = vmul.f32 %v654, 1.442695
        %v662 = vpow.pop %v661
        %v663 = vadd.f32 %v656, 1.0
        %v664 = vadd.f32 %v658, 1.0
        %v665 = vadd.f32 %v660, 1.0
        %v666 = vadd.f32 %v662, 1.0
        %v667 = vrcp.pop %v663
        %v668 = vmul.f32 1.0, %v667
        %v669 = vrcp.pop %v664
        %v670 = vmul.f32 1.0, %v669
        %v671 = vrcp.pop %v665
        %v672 = vmul.f32 1.0, %v671
        %v673 = vrcp.pop %v666
        %v674 = vmul.f32 1.0, %v673
        %675 = vst [vmem:[%s302] sm:$0xff] %v668
        %676 = vst [vmem:[%s302 + $0x8] sm:$0xff] %v670
        %677 = vst [vmem:[%s302 + $0x10] sm:$0xff] %v672
        %678 = vst [vmem:[%s302 + $0x18] sm:$0xff] %v674
        %s679 = sand.u32 %s183, 1
        %s680 = scalar_lea.sflag [#allocation4], %s679
        %s681 = sand.u32 %s183, 1
        %s682 = smul.addr %s681, 32
        %s683 = scalar_lea.vmem [#allocation7], %s682
        // Predicated region
        $region57: #{tpu_custom_call.1} parent=47 // pred_check
          %p684 = pneg %p193
        $region58: #{tpu_custom_call.1} parent=47 // pred_check_branch
          %686 = sbr.rel (%p684) target = $region60
        $region59: #{tpu_custom_call.1} parent=47 // pred_region
          %s687 = smul.u32 2, %s23
          %s689 = ssub.s32 512, 512
          %690 = vsyncadd %s680, %s689
          %s691 = smul.addr %s687, 2
          %s692 = smul.addr %s691, 128
          %s693 = scalar_lea.hbm %s7, %s692
          %s694 = sshll.u32 %s683, 4
          %s695 = int_to_ptr.vmem [resolvable:$true] %s694
          %700 = dma.vmem_to_hbm [thread:$0]  %s695, 512, %s693, %s680, 256, 256, 16
        $region60: #{tpu_custom_call.1} parent=47 // pred_fallthru
          _
      $region48: #{tpu_custom_call.1} parent=5 // pred_fallthru
        _
      %p701 = scmp.le.s32.totalorder 2, %s18
      // Predicated region
      $region61: #{tpu_custom_call.1} parent=5 // pred_check
        %p702 = pneg %p701
      $region62: #{tpu_custom_call.1} parent=5 // pred_check_branch
        %704 = sbr.rel (%p702) target = $region64
      $region63: #{tpu_custom_call.1} parent=5 // pred_region
        %s705 = ssub.s32 %s18, 2
        // Predicated region
        $region65: #{tpu_custom_call.1} parent=63 // pred_check
          %p706 = pneg %p199
        $region66: #{tpu_custom_call.1} parent=63 // pred_check_branch
          %708 = sbr.rel (%p706) target = $region68
        $region67: #{tpu_custom_call.1} parent=63 // pred_region
          %s709 = sand.u32 %s184, 1
          %s710 = scalar_lea.sflag [#allocation4], %s709
          %s711 = sand.u32 %s184, 1
          %s712 = smul.addr %s711, 32
          %s713 = scalar_lea.vmem [#allocation7], %s712
          %714 = dma.done %s710, 512
        $region68: #{tpu_custom_call.1} parent=63 // pred_fallthru
          _
      $region64: #{tpu_custom_call.1} parent=5 // pred_fallthru
        _
    $region6: #{tpu_custom_call.1} parent=1 // loop_footer
      %s22 = sadd.s32 1, %s18
    $region7: #{tpu_custom_call.1} parent=1 // loop_footer_branch
      %17 = sbr.rel target = $region3
    $region8: #{tpu_custom_call.1} parent=1 // loop_exit
      _
    %715 = vsyncpa [#allocation3], 1
    %s716 = scalar_lea.sflag [#allocation3], 1
    %717 = vsyncpa %s716, 1
    %718 = vsyncpa [#allocation6], 1
    %719 = vsyncpa [#allocation4], 1
    %s720 = scalar_lea.sflag [#allocation4], 1
    %721 = vsyncpa %s720, 1

</llo_original>
